<compile_context>
chip_gen: v6e
topology: v6e:2x2x1
jax: 0.10.0
libtpu: 0.0.40
codegen_flags: <defaults>
</compile_context>

<pallas_src>
import numpy as np
import jax
import jax.numpy as jnp
from jax import lax
from jax.experimental import pallas as pl
from jax.experimental.pallas import tpu as pltpu


def _permute_kernel(x_ref, src_ref, mask_ref, o_ref):
    """One block of `bb` batch samples per grid step.

    x_ref   : VMEM (bb, C, T)        -- native channel-major samples
    src_ref : VMEM (bb, 1, T) int32  -- src[b, 0, t] = source time index for output t
    mask_ref: VMEM (bb, 1, 1) int32  -- 1 -> permute this sample, 0 -> pass through
    o_ref   : VMEM (bb, C, T)
    """
    x = x_ref[...]                      # (bb, C, T)
    src = src_ref[...]                  # (bb, 1, T)
    bb = x.shape[0]
    t = x.shape[2]

    # One-hot selection matrix built in VMEM (no extra HBM bytes):
    #   P[b, s, t_out] = (s == src[b, t_out])
    s_iota = lax.broadcasted_iota(jnp.int32, (bb, t, t), 1)
    onehot = (s_iota == src).astype(x.dtype)          # (bb, 1, t) broadcasts -> (bb, t, t)

    # permuted[b, c, t_out] = sum_s x[b, c, s] * P[b, s, t_out]   (MXU, lane-dense)
    # Multiplying by an exact 0/1 matrix with HIGHEST precision keeps values exact.
    # TODO(synk): for very large T (T*T*4 bytes ~ VMEM), tile the time axis of
    # the selection matmul instead of materializing the full (T, T) one-hot.
    permuted = jnp.einsum(
        "bcs,bst->bct", x, onehot,
        preferred_element_type=jnp.float32,
        precision=jax.lax.Precision.HIGHEST,
    ).astype(x.dtype)

    keep = mask_ref[...] != 0                          # (bb, 1, 1) -> broadcast over (C, T)
    o_ref[...] = jnp.where(keep, permuted, x)


def _pick_block_batch(B, C, T, itemsize, target_bytes=2 << 20):
    """Choose how many batch samples to pack into one grid step."""
    # Per-sample working set: x block + out block (double buffered by the
    # pipeline) + the in-kernel (T, T) one-hot + the index row.
    per_sample = 4 * C * T * itemsize + T * T * 4 + 8 * T
    bb = max(1, min(B, target_bytes // max(per_sample, 1)))
    if B >= 2:
        # Keep at least 2 balanced grid steps so v7x's two TensorCores both work.
        bb = max(1, min(bb, B // 2))
    # Prefer a divisor of B (avoids padded tail blocks).
    while B % bb != 0:
        bb -= 1
    return bb


def permute_forward(x, src, mask, *, block_batch=None):
    """Forward pass of the Permute augmentation.

    x    : (B, C, T) array (as in the PyTorch module)
    src  : (B, T) int    -- src[b, t] = source time index for output position t
    mask : (B,)   int/bool -- 1 -> use the permuted sample, 0 -> pass through
    returns (B, C, T) array, same dtype as x.
    """
    B, C, T = x.shape
    if block_batch is None:
        block_batch = _pick_block_batch(B, C, T, np.dtype(x.dtype).itemsize)
    bb = block_batch
    assert B % bb == 0
    grid = (B // bb,)

    src3 = src.astype(jnp.int32).reshape(B, 1, T)
    mask3 = mask.astype(jnp.int32).reshape(B, 1, 1)

    return pl.pallas_call(
        _permute_kernel,
        out_shape=jax.ShapeDtypeStruct((B, C, T), x.dtype),
        grid=grid,
        in_specs=[
            pl.BlockSpec((bb, C, T), lambda i: (i, 0, 0)),   # x
            pl.BlockSpec((bb, 1, T), lambda i: (i, 0, 0)),   # src indices
            pl.BlockSpec((bb, 1, 1), lambda i: (i, 0, 0)),   # per-sample mask
        ],
        out_specs=pl.BlockSpec((bb, C, T), lambda i: (i, 0, 0)),
        compiler_params=pltpu.CompilerParams(
            dimension_semantics=("parallel",)),
    )(x, src3, mask3)


def make_time_segment_permutation(B, T, num_segments, rng):
    """Host-side index setup mirroring
    time_segment_permutation_transform_improved (the original module also does
    this with numpy on host).  Returns int32 source indices of shape (B, T).
    """
    # TODO(synk): np.random segment sampling/shuffling stays host-side glue;
    # only index construction, not the hot path.
    src = np.empty((B, T), dtype=np.int32)
    seg_pts = np.sort(rng.choice(T, size=(B, num_segments - 1)), axis=1)
    idx = np.arange(T)
    for i in range(B):
        pieces = np.split(idx, np.append(seg_pts[i], T))
        order = rng.permutation(len(pieces))
        src[i] = np.concatenate([pieces[j] for j in order], axis=0)
    return src


if __name__ == "__main__":
    B, C, T = 2, 4, 16
    num_segments = 10

    key = jax.random.PRNGKey(0)
    kx, km = jax.random.split(key)
    x = jax.random.normal(kx, (B, C, T), dtype=jnp.float32)
    # torch.rand(B, 1, 1) < 0.5  -> per-sample Bernoulli(0.5)
    mask = (jax.random.uniform(km, (B,)) < 0.5).astype(jnp.int32)

    rng = np.random.default_rng(0)
    src = make_time_segment_permutation(B, T, num_segments, rng)
    src_j = jnp.asarray(src, dtype=jnp.int32)

    out = permute_forward(x, src_j, mask)
    out = jax.block_until_ready(out)

    # Reference (plain numpy) check of the forward semantics.
    x_np = np.asarray(x)
    x_perm_ref = np.take_along_axis(x_np, src[:, None, :].astype(np.int64), axis=2)
    m_np = np.asarray(mask).astype(bool)[:, None, None]
    ref = np.where(m_np, x_perm_ref, x_np)

    assert out.shape == (B, C, T) and out.dtype == x.dtype
    np.testing.assert_allclose(np.asarray(out), ref, rtol=1e-6, atol=1e-6)

    print("KERNEL_OK")
</pallas_src>

<mosaic_0001>
module attributes {stable_mosaic.version = 11 : i64} {
  func.func @_permute_kernel(%arg0: i32, %arg1: memref<1x4x16xf32, #tpu.memory_space<vmem>>, %arg2: memref<1x1x16xi32, #tpu.memory_space<vmem>>, %arg3: memref<1x1x1xi32, #tpu.memory_space<vmem>>, %arg4: memref<1x4x16xf32, #tpu.memory_space<vmem>>) attributes {dimension_semantics = [#tpu.dimension_semantics<parallel>], iteration_bounds = array<i64: 2>, scalar_prefetch = 0 : i64, scratch_operands = 0 : i64, tpu.core_type = #tpu.core_type<tc>, window_params = [{transform_indices = @transform_0, window_bounds = array<i64: 1, 4, 16>}, {transform_indices = @transform_1, window_bounds = array<i64: 1, 1, 16>}, {transform_indices = @transform_2, window_bounds = array<i64: 1, 1, 1>}, {transform_indices = @transform_3, window_bounds = array<i64: 1, 4, 16>}]} {
    %c0 = arith.constant 0 : index
    %c0_0 = arith.constant 0 : index
    %c0_1 = arith.constant 0 : index
    %0 = vector.load %arg1[%c0, %c0_0, %c0_1] : memref<1x4x16xf32, #tpu.memory_space<vmem>>, vector<1x4x16xf32>
    %c0_2 = arith.constant 0 : index
    %c0_3 = arith.constant 0 : index
    %c0_4 = arith.constant 0 : index
    %1 = vector.load %arg2[%c0_2, %c0_3, %c0_4] : memref<1x1x16xi32, #tpu.memory_space<vmem>>, vector<1x1x16xi32>
    %2 = tpu.iota {dimensions = array<i32: 1>} : vector<1x16x16xi32>
    %3 = vector.broadcast %1 : vector<1x1x16xi32> to vector<1x16x16xi32>
    %4 = arith.cmpi eq, %2, %3 : vector<1x16x16xi32>
    %5 = arith.extui %4 : vector<1x16x16xi1> to vector<1x16x16xi32>
    %6 = arith.sitofp %5 : vector<1x16x16xi32> to vector<1x16x16xf32>
    "tpu.trace_start"() <{level = 10 : i32, message = "bcs,bst->bct"}> : () -> ()
    %cst = arith.constant dense<0.000000e+00> : vector<1x4x16xf32>
    %7 = tpu.matmul %0, %6, %cst {dimension_numbers = #tpu.dot_dimension_numbers<[2], [1], [1], [2], [0, 0, 0, 1, 1, 2], [0], [0]>, precision = #tpu.contract_precision<fp32>} : vector<1x4x16xf32>, vector<1x16x16xf32>, vector<1x4x16xf32> -> vector<1x4x16xf32>
    "tpu.trace_stop"() : () -> ()
    %c0_5 = arith.constant 0 : index
    %c0_6 = arith.constant 0 : index
    %c0_7 = arith.constant 0 : index
    %8 = vector.load %arg3[%c0_5, %c0_6, %c0_7] : memref<1x1x1xi32, #tpu.memory_space<vmem>>, vector<1x1x1xi32>
    %c0_i32 = arith.constant 0 : i32
    %9 = vector.broadcast %c0_i32 : i32 to vector<1x1x1xi32>
    %10 = arith.cmpi ne, %8, %9 : vector<1x1x1xi32>
    %11 = vector.shape_cast %10 : vector<1x1x1xi1> to vector<1x1x1xi1>
    %12 = vector.broadcast %11 : vector<1x1x1xi1> to vector<1x4x16xi1>
    %13 = arith.select %12, %7, %0 : vector<1x4x16xi1>, vector<1x4x16xf32>
    %c0_8 = arith.constant 0 : index
    %c0_9 = arith.constant 0 : index
    %c0_10 = arith.constant 0 : index
    %14 = vector.load %arg4[%c0_8, %c0_9, %c0_10] : memref<1x4x16xf32, #tpu.memory_space<vmem>>, vector<1x4x16xf32>
    tpu.vector_store %arg4[%c0_8, %c0_9, %c0_10], %13 {strides = array<i32>} : memref<1x4x16xf32, #tpu.memory_space<vmem>>, vector<1x4x16xf32>,
    return
  }
  func.func @transform_0(%arg0: i32) -> (i32, i32, i32) {
    %c0_i32 = arith.constant 0 : i32
    %c0_i32_0 = arith.constant 0 : i32
    %c0_i32_1 = arith.constant 0 : i32
    return %arg0, %c0_i32, %c0_i32_0 : i32, i32, i32
  }
  func.func @transform_1(%arg0: i32) -> (i32, i32, i32) {
    %c0_i32 = arith.constant 0 : i32
    %c0_i32_0 = arith.constant 0 : i32
    %c0_i32_1 = arith.constant 0 : i32
    return %arg0, %c0_i32, %c0_i32_0 : i32, i32, i32
  }
  func.func @transform_2(%arg0: i32) -> (i32, i32, i32) {
    %c0_i32 = arith.constant 0 : i32
    %c0_i32_0 = arith.constant 0 : i32
    %c0_i32_1 = arith.constant 0 : i32
    return %arg0, %c0_i32, %c0_i32_0 : i32, i32, i32
  }
  func.func @transform_3(%arg0: i32) -> (i32, i32, i32) {
    %c0_i32 = arith.constant 0 : i32
    %c0_i32_0 = arith.constant 0 : i32
    %c0_i32_1 = arith.constant 0 : i32
    return %arg0, %c0_i32, %c0_i32_0 : i32, i32, i32
  }
}

</mosaic_0001>

<llo_original>
// kernel: tpu_custom_call.1
$region0: #{tpu_custom_call.1}
  #allocation0 [shape = 'u32[]', space=smem, size = 0x4, offset = 0x4, fixed_abs, tag = 'smem constant byte address 0x4 - core index']
  #allocation1 [shape = 'u32[144,128]{1,0:T(1,128)}', space=vmem, size = 0x12000, scoped, tag = 'internal scratch']
  %s0 = inlined_call_operand.hbm [shape: f32[2,4,16], index: 0, kind: input, shape index: {}]
  %s1 = inlined_call_operand.vmem [shape: s32[2,1,16], index: 1, kind: input, shape index: {}]
  %s2 = inlined_call_operand.vmem [shape: s32[2,1,1], index: 2, kind: input, shape index: {}]
  %s3 = inlined_call_operand.hbm [shape: f32[2,4,16], index: 3, kind: output, shape index: {}]
  %s4 = sld [smem:[#allocation0]]
  $region49: #{tpu_custom_call.1} parent=0
    _
  %s6 = ssub.s32 1, %s4
  %s7 = scalar_select 0, %s6, %s4
  $region1: #{tpu_custom_call.1} parent=0
    #allocation2 [shape = 'u8[4096]{0}', space=vmem, size = 0x1000, scoped, tag = 'input window, operand 0']
    #allocation3 [shape = 's32[2]{0}', space=sflag, size = 0x8, scoped, tag = 'scoped memory for tpu_custom_call.1']
    #allocation4 [shape = 's32[2]{0}', space=sflag, size = 0x8, scoped, tag = 'scoped memory for tpu_custom_call.1']
    #allocation5 [shape = 'u8[4096]{0}', space=vmem, size = 0x1000, scoped, tag = 'output window, operand 0']
    %8 = vsyncpa [#allocation3], 0
    %s9 = scalar_lea.sflag [#allocation3], 1
    %10 = vsyncpa %s9, 0
    %11 = vsyncpa [#allocation4], 0
    %s12 = scalar_lea.sflag [#allocation4], 1
    %13 = vsyncpa %s12, 0
    loop: start=0, step=1, limit=4
    $region2: #{tpu_custom_call.1} parent=1 // loop_pre_header
      _
    $region3: #{tpu_custom_call.1} parent=1 // loop_header
      %s15 = sphi 0, %s19
      %p16 = scmp.ge.s32.totalorder %s15, 4
      %s25 = sphi 0, %s27
      %s28 = sphi 0, %s25
      %s29 = sphi 0, %s28
      %s45 = sphi 0, %s29
      %s51 = sphi 0, %s53
      %s54 = sphi 0, %s51
      %s55 = sphi 0, %s54
      %s71 = sphi 0, %s55
      %s77 = sphi 0, %s79
      %s80 = sphi 0, %s77
      %s81 = sphi 0, %s80
      %s97 = sphi 0, %s81
      %s103 = sphi 0, %s105
      %s106 = sphi 0, %s103
      %s107 = sphi 0, %s106
      %s123 = sphi 0, %s107
    $region4: #{tpu_custom_call.1} parent=1 // loop_header_branch
      %18 = sbr.rel (%p16) target = $region8
    $region5: #{tpu_custom_call.1} parent=1 // loop_body
      %s20 = ssub.s32 %s15, 1
      %s21 = ssub.s32 %s15, 2
      %s22 = sadd.s32 %s15, 1
      %s23 = ssub.s32 %s15, %s22
      %p24 = scmp.eq.s32.totalorder %s23, 0
      %s26 = sadd.s32 %s25, 1
      %s27 = scalar_select %p24, %s25, %s26
      %p30 = pneg %p24
      %p31 = scmp.eq.s32.totalorder %s15, 1
      %p32 = por %p30, %p31
      %p33 = scmp.ne.s32.totalorder %s25, %s28
      %p34 = scmp.eq.s32.totalorder %s15, 0
      %p35 = por %p33, %p34
      %p36 = scmp.ne.s32.totalorder %s25, %s28
      %p37 = scmp.eq.s32.totalorder %s20, 1
      %p38 = por %p36, %p37
      %p39 = scmp.ne.s32.totalorder %s28, %s29
      %p40 = scmp.eq.s32.totalorder %s20, 0
      %p41 = por %p39, %p40
      %p42 = scmp.ne.s32.totalorder %s28, %s29
      %p43 = scmp.eq.s32.totalorder %s21, 1
      %p44 = por %p42, %p43
      %p46 = scmp.ne.s32.totalorder %s29, %s45
      %p47 = scmp.eq.s32.totalorder %s21, 0
      %p48 = por %p46, %p47
      %s49 = ssub.s32 %s15, %s22
      %p50 = scmp.eq.s32.totalorder %s49, 0
      %s52 = sadd.s32 %s51, 1
      %s53 = scalar_select %p50, %s51, %s52
      %p56 = pneg %p50
      %p57 = scmp.eq.s32.totalorder %s15, 1
      %p58 = por %p56, %p57
      %p59 = scmp.ne.s32.totalorder %s51, %s54
      %p60 = scmp.eq.s32.totalorder %s15, 0
      %p61 = por %p59, %p60
      %p62 = scmp.ne.s32.totalorder %s51, %s54
      %p63 = scmp.eq.s32.totalorder %s20, 1
      %p64 = por %p62, %p63
      %p65 = scmp.ne.s32.totalorder %s54, %s55
      %p66 = scmp.eq.s32.totalorder %s20, 0
      %p67 = por %p65, %p66
      %p68 = scmp.ne.s32.totalorder %s54, %s55
      %p69 = scmp.eq.s32.totalorder %s21, 1
      %p70 = por %p68, %p69
      %p72 = scmp.ne.s32.totalorder %s55, %s71
      %p73 = scmp.eq.s32.totalorder %s21, 0
      %p74 = por %p72, %p73
      %s75 = ssub.s32 %s15, %s22
      %p76 = scmp.eq.s32.totalorder %s75, 0
      %s78 = sadd.s32 %s77, 1
      %s79 = scalar_select %p76, %s77, %s78
      %p82 = pneg %p76
      %p83 = scmp.eq.s32.totalorder %s15, 1
      %p84 = por %p82, %p83
      %p85 = scmp.ne.s32.totalorder %s77, %s80
      %p86 = scmp.eq.s32.totalorder %s15, 0
      %p87 = por %p85, %p86
      %p88 = scmp.ne.s32.totalorder %s77, %s80
      %p89 = scmp.eq.s32.totalorder %s20, 1
      %p90 = por %p88, %p89
      %p91 = scmp.ne.s32.totalorder %s80, %s81
      %p92 = scmp.eq.s32.totalorder %s20, 0
      %p93 = por %p91, %p92
      %p94 = scmp.ne.s32.totalorder %s80, %s81
      %p95 = scmp.eq.s32.totalorder %s21, 1
      %p96 = por %p94, %p95
      %p98 = scmp.ne.s32.totalorder %s81, %s97
      %p99 = scmp.eq.s32.totalorder %s21, 0
      %p100 = por %p98, %p99
      %s101 = ssub.s32 %s15, %s22
      %p102 = scmp.eq.s32.totalorder %s101, 0
      %s104 = sadd.s32 %s103, 1
      %s105 = scalar_select %p102, %s103, %s104
      %p108 = pneg %p102
      %p109 = scmp.eq.s32.totalorder %s15, 1
      %p110 = por %p108, %p109
      %p111 = scmp.ne.s32.totalorder %s103, %s106
      %p112 = scmp.eq.s32.totalorder %s15, 0
      %p113 = por %p111, %p112
      %p114 = scmp.ne.s32.totalorder %s103, %s106
      %p115 = scmp.eq.s32.totalorder %s20, 1
      %p116 = por %p114, %p115
      %p117 = scmp.ne.s32.totalorder %s106, %s107
      %p118 = scmp.eq.s32.totalorder %s20, 0
      %p119 = por %p117, %p118
      %p120 = scmp.ne.s32.totalorder %s106, %s107
      %p121 = scmp.eq.s32.totalorder %s21, 1
      %p122 = por %p120, %p121
      %p124 = scmp.ne.s32.totalorder %s107, %s123
      %p125 = scmp.eq.s32.totalorder %s21, 0
      %p126 = por %p124, %p125
      %p127 = scmp.le.s32.totalorder 1, %s15
      %p128 = scmp.lt.s32.totalorder %s15, 3
      %p129 = pnand %p127, %p128
      %p130 = pneg %p129
      // Predicated region
      $region9: #{tpu_custom_call.1} parent=5 // pred_check
        _
      $region10: #{tpu_custom_call.1} parent=5 // pred_check_branch
        %132 = sbr.rel (%p129) target = $region12
      $region11: #{tpu_custom_call.1} parent=5 // pred_region
        %s133 = ssub.s32 %s15, 1
      $region12: #{tpu_custom_call.1} parent=5 // pred_fallthru
        _
      %p134 = scmp.lt.s32.totalorder %s15, 2
      // Predicated region
      $region13: #{tpu_custom_call.1} parent=5 // pred_check
        %p135 = pneg %p134
      $region14: #{tpu_custom_call.1} parent=5 // pred_check_branch
        %137 = sbr.rel (%p135) target = $region16
      $region15: #{tpu_custom_call.1} parent=5 // pred_region
        // Predicated region
        $region17: #{tpu_custom_call.1} parent=15 // pred_check
          %p138 = pneg %p35
        $region18: #{tpu_custom_call.1} parent=15 // pred_check_branch
          %140 = sbr.rel (%p138) target = $region20
        $region19: #{tpu_custom_call.1} parent=15 // pred_region
          %s141 = sand.u32 %s25, 1
          %s142 = scalar_lea.sflag [#allocation3], %s141
          %s143 = sand.u32 %s25, 1
          %s144 = smul.addr %s143, 4
          %s145 = scalar_lea.vmem [#allocation2], %s144
          %s147 = ssub.s32 64, 64
          %148 = vsyncadd %s142, %s147
          %s149 = smul.addr %s15, 64
          %s150 = scalar_lea.hbm %s0, %s149
          %s152 = sshll.u32 %s145, 4
          %s153 = int_to_ptr.vmem [resolvable:$true] %s152
          %155 = dma.hbm_to_vmem [thread:$0]  %s150, 64, %s153, %s142
        $region20: #{tpu_custom_call.1} parent=15 // pred_fallthru
          _
        // Predicated region
        $region21: #{tpu_custom_call.1} parent=15 // pred_check
          %p156 = pneg %p61
        $region22: #{tpu_custom_call.1} parent=15 // pred_check_branch
          %158 = sbr.rel (%p156) target = $region24
        $region23: #{tpu_custom_call.1} parent=15 // pred_region
          %p159 = scmp.lt.s32.totalorder %s15, 1
          %s160 = scalar_select %p159, %s15, 1
          %s161 = scalar_lea.vmem %s1, %s160
        $region24: #{tpu_custom_call.1} parent=15 // pred_fallthru
          _
        // Predicated region
        $region25: #{tpu_custom_call.1} parent=15 // pred_check
          %p162 = pneg %p87
        $region26: #{tpu_custom_call.1} parent=15 // pred_check_branch
          %164 = sbr.rel (%p162) target = $region28
        $region27: #{tpu_custom_call.1} parent=15 // pred_region
          %p165 = scmp.lt.s32.totalorder %s15, 1
          %s166 = scalar_select %p165, %s15, 1
          %s167 = scalar_lea.vmem %s2, %s166
        $region28: #{tpu_custom_call.1} parent=15 // pred_fallthru
          _
      $region16: #{tpu_custom_call.1} parent=5 // pred_fallthru
        _
      %p168 = scmp.le.s32.totalorder 1, %s15
      %p169 = scmp.lt.s32.totalorder %s15, 3
      %p170 = pnand %p168, %p169
      %p171 = pneg %p170
      // Predicated region
      $region29: #{tpu_custom_call.1} parent=5 // pred_check
        _
      $region30: #{tpu_custom_call.1} parent=5 // pred_check_branch
        %173 = sbr.rel (%p170) target = $region32
      $region31: #{tpu_custom_call.1} parent=5 // pred_region
        %s174 = ssub.s32 %s15, 1
        %s175 = sand.u32 %s28, 1
        %s176 = scalar_lea.sflag [#allocation3], %s175
        %s177 = sand.u32 %s28, 1
        %s178 = smul.addr %s177, 4
        %s179 = scalar_lea.vmem [#allocation2], %s178
        // Predicated region
        $region33: #{tpu_custom_call.1} parent=31 // pred_check
          %p180 = pneg %p41
        $region34: #{tpu_custom_call.1} parent=31 // pred_check_branch
          %182 = sbr.rel (%p180) target = $region36
        $region35: #{tpu_custom_call.1} parent=31 // pred_region
          %183 = dma.done %s176, 64
        $region36: #{tpu_custom_call.1} parent=31 // pred_fallthru
          _
        %s184 = sand.u32 %s28, 1
        %s185 = scalar_lea.sflag [#allocation3], %s184
        %s186 = sand.u32 %s28, 1
        %s187 = smul.addr %s186, 4
        %s188 = scalar_lea.vmem [#allocation2], %s187
        %p189 = pneg %p41
        %p190 = pneg %p38
        %p191 = scmp.lt.s32.totalorder %s20, 1
        %s192 = scalar_select %p191, %s20, 1
        %s193 = scalar_lea.vmem %s1, %s192
        %p194 = pneg %p67
        %p195 = pneg %p64
        %p196 = scmp.lt.s32.totalorder %s20, 1
        %s197 = scalar_select %p196, %s20, 1
        %s198 = scalar_lea.vmem %s2, %s197
        %p199 = pneg %p93
        %p200 = pneg %p90
        %p201 = pneg %p119
        %p202 = pneg %p116
        %s203 = sand.u32 %s106, 1
        %s204 = scalar_lea.sflag [#allocation4], %s203
        %s205 = sand.u32 %s106, 1
        %s206 = smul.addr %s205, 4
        %s207 = scalar_lea.vmem [#allocation5], %s206
        %p208 = scmp.lt.s32.totalorder %s20, 1
        %s209 = scalar_select %p208, %s20, 1
        %s210 = scalar_lea.vmem %s1, %s209
        %p211 = scmp.lt.s32.totalorder %s20, 1
        %s212 = scalar_select %p211, %s20, 1
        %s213 = scalar_lea.vmem %s2, %s212
        %v214 = vld [vmem:[%s179] sm:$0xf]
        %v215 = vld [vmem:[%s210] sm:$0x1]
        %v216 = vlaneseq
        %v217 = vshrl.u32 %v216, 7
        %v218 = vadd.s32 %v217, 8
        %v219 = vlaneseq
        %v220 = vshrl.u32 %v219, 7
        %v221 = vsub.s32 0, %v220
        %v222 = vrot.slane %v215, %v221
        %vm223 = vcmp.eq.s32.totalorder %v217, %v222
        %vm224 = vcmp.eq.s32.totalorder %v218, %v222
        %v225 = vsel %vm223, 1, 0
        %v226 = vsel %vm224, 1, 0
        %v227 = vcvt.s32.f32 %v225
        %v228 = vcvt.s32.f32 %v226
        %vm229 = vcmask 130048
        %v231 = vsel %vm229, %v214, 0
        %233 = vmatprep.subr.mxu0 0.0
        %234 = vmatpush1.msra.mxu0 0.0
        %235 = vmatprep.subr.mxu0 0.0
        %236 = vmatpush1.msra.mxu0 0.0
        %237 = vmatprep.subr.mxu0 0.0
        %238 = vmatpush1.msra.mxu0 0.0
        %239 = vmatprep.subr.mxu0 0.0
        %240 = vmatpush1.msra.mxu0 0.0
        %241 = vmatprep.subr.mxu0 0.0
        %242 = vmatpush1.msra.mxu0 0.0
        %243 = vmatprep.subr.mxu0 0.0
        %244 = vmatpush1.msra.mxu0 0.0
        %245 = vmatprep.subr.mxu0 0.0
        %246 = vmatpush1.msra.mxu0 0.0
        %247 = vmatprep.subr.mxu0 0.0
        %248 = vmatpush1.msra.mxu0 0.0
        %249 = vmatprep.subr.mxu0 0.0
        %250 = vmatpush1.msra.mxu0 0.0
        %251 = vmatprep.subr.mxu0 0.0
        %252 = vmatpush1.msra.mxu0 0.0
        %253 = vmatprep.subr.mxu0 0.0
        %254 = vmatpush1.msra.mxu0 0.0
        %255 = vmatprep.subr.mxu0 0.0
        %256 = vmatpush1.msra.mxu0 0.0
        %257 = vmatprep.subr.mxu0 0.0
        %258 = vmatpush1.msra.mxu0 0.0
        %259 = vmatprep.subr.mxu0 0.0
        %260 = vmatpush1.msra.mxu0 0.0
        %261 = vmatprep.subr.mxu0 0.0
        %v262 = vand.u32 %v228, 4294901760
        %263 = vmatpush1.msra.mxu0 %v262
        %264 = vmatprep.subr.mxu0 0.0
        %v265 = vand.u32 %v227, 4294901760
        %266 = vmatpush1.msra.mxu0 %v265
        %267 = vmatprep.subr.mxu0 0.0
        %268 = vmatpush2.msra.mxu0 0.0
        %269 = vmatprep.subr.mxu0 0.0
        %270 = vmatpush2.msra.mxu0 0.0
        %271 = vmatprep.subr.mxu0 0.0
        %272 = vmatpush2.msra.mxu0 0.0
        %273 = vmatprep.subr.mxu0 0.0
        %274 = vmatpush2.msra.mxu0 0.0
        %275 = vmatprep.subr.mxu0 0.0
        %276 = vmatpush2.msra.mxu0 0.0
        %277 = vmatprep.subr.mxu0 0.0
        %278 = vmatpush2.msra.mxu0 0.0
        %279 = vmatprep.subr.mxu0 0.0
        %280 = vmatpush2.msra.mxu0 0.0
        %281 = vmatprep.subr.mxu0 0.0
        %282 = vmatpush2.msra.mxu0 0.0
        %283 = vmatprep.subr.mxu0 0.0
        %284 = vmatpush2.msra.mxu0 0.0
        %285 = vmatprep.subr.mxu0 0.0
        %286 = vmatpush2.msra.mxu0 0.0
        %287 = vmatprep.subr.mxu0 0.0
        %288 = vmatpush2.msra.mxu0 0.0
        %289 = vmatprep.subr.mxu0 0.0
        %290 = vmatpush2.msra.mxu0 0.0
        %291 = vmatprep.subr.mxu0 0.0
        %292 = vmatpush2.msra.mxu0 0.0
        %293 = vmatprep.subr.mxu0 0.0
        %294 = vmatpush2.msra.mxu0 0.0
        %295 = vmatprep.subr.mxu0 0.0
        %296 = vmatpush2.msra.mxu0 0.0
        %297 = vmatprep.subr.mxu0 0.0
        %298 = vmatpush2.msra.mxu0 0.0
        %299 = vmatprep.mubr.f32.mxu0 0.0
        %v300 = vand.u32 %v231, 4294901760
        %v301 = vsub.f32 %v231, %v300
        %v302 = vand.u32 %v301, 4294901760
        %v303 = vsub.f32 %v301, %v302
        %v304 = vand.u32 %v303, 4294901760
        %305 = vmatmul.mubr.f32.gmra.mxu0 %v304
        %v306 = vpop.f32.mrf.mxu0
        %v307 = vadd.f32 0.0, %v306
        %v308 = vpop.f32.mrf.mxu0
        %309 = vdwg.mxu0
        %310 = vmatprep.subr.mxu0 0.0
        %311 = vmatpush1.msra.mxu0 0.0
        %312 = vmatprep.subr.mxu0 0.0
        %313 = vmatpush1.msra.mxu0 0.0
        %314 = vmatprep.subr.mxu0 0.0
        %315 = vmatpush1.msra.mxu0 0.0
        %316 = vmatprep.subr.mxu0 0.0
        %317 = vmatpush1.msra.mxu0 0.0
        %318 = vmatprep.subr.mxu0 0.0
        %319 = vmatpush1.msra.mxu0 0.0
        %320 = vmatprep.subr.mxu0 0.0
        %321 = vmatpush1.msra.mxu0 0.0
        %322 = vmatprep.subr.mxu0 0.0
        %323 = vmatpush1.msra.mxu0 0.0
        %324 = vmatprep.subr.mxu0 0.0
        %325 = vmatpush1.msra.mxu0 0.0
        %326 = vmatprep.subr.mxu0 0.0
        %327 = vmatpush1.msra.mxu0 0.0
        %328 = vmatprep.subr.mxu0 0.0
        %329 = vmatpush1.msra.mxu0 0.0
        %330 = vmatprep.subr.mxu0 0.0
        %331 = vmatpush1.msra.mxu0 0.0
        %332 = vmatprep.subr.mxu0 0.0
        %333 = vmatpush1.msra.mxu0 0.0
        %334 = vmatprep.subr.mxu0 0.0
        %335 = vmatpush1.msra.mxu0 0.0
        %336 = vmatprep.subr.mxu0 0.0
        %337 = vmatpush1.msra.mxu0 0.0
        %338 = vmatprep.subr.mxu0 0.0
        %v339 = vand.u32 %v228, 4294901760
        %v340 = vsub.f32 %v228, %v339
        %v341 = vand.u32 %v340, 4294901760
        %v342 = vsub.f32 %v340, %v341
        %v343 = vand.u32 %v342, 4294901760
        %344 = vmatpush1.msra.mxu0 %v343
        %345 = vmatprep.subr.mxu0 0.0
        %v346 = vand.u32 %v227, 4294901760
        %v347 = vsub.f32 %v227, %v346
        %v348 = vand.u32 %v347, 4294901760
        %v349 = vsub.f32 %v347, %v348
        %v350 = vand.u32 %v349, 4294901760
        %351 = vmatpush1.msra.mxu0 %v350
        %352 = vmatprep.subr.mxu0 0.0
        %353 = vmatpush2.msra.mxu0 0.0
        %354 = vmatprep.subr.mxu0 0.0
        %355 = vmatpush2.msra.mxu0 0.0
        %356 = vmatprep.subr.mxu0 0.0
        %357 = vmatpush2.msra.mxu0 0.0
        %358 = vmatprep.subr.mxu0 0.0
        %359 = vmatpush2.msra.mxu0 0.0
        %360 = vmatprep.subr.mxu0 0.0
        %361 = vmatpush2.msra.mxu0 0.0
        %362 = vmatprep.subr.mxu0 0.0
        %363 = vmatpush2.msra.mxu0 0.0
        %364 = vmatprep.subr.mxu0 0.0
        %365 = vmatpush2.msra.mxu0 0.0
        %366 = vmatprep.subr.mxu0 0.0
        %367 = vmatpush2.msra.mxu0 0.0
        %368 = vmatprep.subr.mxu0 0.0
        %369 = vmatpush2.msra.mxu0 0.0
        %370 = vmatprep.subr.mxu0 0.0
        %371 = vmatpush2.msra.mxu0 0.0
        %372 = vmatprep.subr.mxu0 0.0
        %373 = vmatpush2.msra.mxu0 0.0
        %374 = vmatprep.subr.mxu0 0.0
        %375 = vmatpush2.msra.mxu0 0.0
        %376 = vmatprep.subr.mxu0 0.0
        %377 = vmatpush2.msra.mxu0 0.0
        %378 = vmatprep.subr.mxu0 0.0
        %379 = vmatpush2.msra.mxu0 0.0
        %380 = vmatprep.subr.mxu0 0.0
        %381 = vmatpush2.msra.mxu0 0.0
        %382 = vmatprep.subr.mxu0 0.0
        %383 = vmatpush2.msra.mxu0 0.0
        %384 = vmatprep.mubr.f32.mxu0 0.0
        %v385 = vand.u32 %v231, 4294901760
        %386 = vmatmul.mubr.f32.gmra.mxu0 %v385
        %v387 = vpop.f32.mrf.mxu0
        %v388 = vadd.f32 %v307, %v387
        %v389 = vpop.f32.mrf.mxu0
        %390 = vdwg.mxu0
        %391 = vmatprep.subr.mxu0 0.0
        %392 = vmatpush1.msra.mxu0 0.0
        %393 = vmatprep.subr.mxu0 0.0
        %394 = vmatpush1.msra.mxu0 0.0
        %395 = vmatprep.subr.mxu0 0.0
        %396 = vmatpush1.msra.mxu0 0.0
        %397 = vmatprep.subr.mxu0 0.0
        %398 = vmatpush1.msra.mxu0 0.0
        %399 = vmatprep.subr.mxu0 0.0
        %400 = vmatpush1.msra.mxu0 0.0
        %401 = vmatprep.subr.mxu0 0.0
        %402 = vmatpush1.msra.mxu0 0.0
        %403 = vmatprep.subr.mxu0 0.0
        %404 = vmatpush1.msra.mxu0 0.0
        %405 = vmatprep.subr.mxu0 0.0
        %406 = vmatpush1.msra.mxu0 0.0
        %407 = vmatprep.subr.mxu0 0.0
        %408 = vmatpush1.msra.mxu0 0.0
        %409 = vmatprep.subr.mxu0 0.0
        %410 = vmatpush1.msra.mxu0 0.0
        %411 = vmatprep.subr.mxu0 0.0
        %412 = vmatpush1.msra.mxu0 0.0
        %413 = vmatprep.subr.mxu0 0.0
        %414 = vmatpush1.msra.mxu0 0.0
        %415 = vmatprep.subr.mxu0 0.0
        %416 = vmatpush1.msra.mxu0 0.0
        %417 = vmatprep.subr.mxu0 0.0
        %418 = vmatpush1.msra.mxu0 0.0
        %419 = vmatprep.subr.mxu0 0.0
        %v420 = vand.u32 %v228, 4294901760
        %v421 = vsub.f32 %v228, %v420
        %422 = vmatpush1.msra.mxu0 %v421
        %423 = vmatprep.subr.mxu0 0.0
        %v424 = vand.u32 %v227, 4294901760
        %v425 = vsub.f32 %v227, %v424
        %426 = vmatpush1.msra.mxu0 %v425
        %427 = vmatprep.subr.mxu0 0.0
        %428 = vmatpush2.msra.mxu0 0.0
        %429 = vmatprep.subr.mxu0 0.0
        %430 = vmatpush2.msra.mxu0 0.0
        %431 = vmatprep.subr.mxu0 0.0
        %432 = vmatpush2.msra.mxu0 0.0
        %433 = vmatprep.subr.mxu0 0.0
        %434 = vmatpush2.msra.mxu0 0.0
        %435 = vmatprep.subr.mxu0 0.0
        %436 = vmatpush2.msra.mxu0 0.0
        %437 = vmatprep.subr.mxu0 0.0
        %438 = vmatpush2.msra.mxu0 0.0
        %439 = vmatprep.subr.mxu0 0.0
        %440 = vmatpush2.msra.mxu0 0.0
        %441 = vmatprep.subr.mxu0 0.0
        %442 = vmatpush2.msra.mxu0 0.0
        %443 = vmatprep.subr.mxu0 0.0
        %444 = vmatpush2.msra.mxu0 0.0
        %445 = vmatprep.subr.mxu0 0.0
        %446 = vmatpush2.msra.mxu0 0.0
        %447 = vmatprep.subr.mxu0 0.0
        %448 = vmatpush2.msra.mxu0 0.0
        %449 = vmatprep.subr.mxu0 0.0
        %450 = vmatpush2.msra.mxu0 0.0
        %451 = vmatprep.subr.mxu0 0.0
        %452 = vmatpush2.msra.mxu0 0.0
        %453 = vmatprep.subr.mxu0 0.0
        %454 = vmatpush2.msra.mxu0 0.0
        %455 = vmatprep.subr.mxu0 0.0
        %456 = vmatpush2.msra.mxu0 0.0
        %457 = vmatprep.subr.mxu0 0.0
        %458 = vmatpush2.msra.mxu0 0.0
        %459 = vmatprep.mubr.f32.mxu0 0.0
        %v460 = vand.u32 %v231, 4294901760
        %v461 = vsub.f32 %v231, %v460
        %462 = vmatmul.mubr.f32.gmra.mxu0 %v461
        %v463 = vpop.f32.mrf.mxu0
        %v464 = vadd.f32 %v388, %v463
        %v465 = vpop.f32.mrf.mxu0
        %466 = vdwg.mxu0
        %467 = vmatprep.subr.mxu0 0.0
        %468 = vmatpush1.msra.mxu0 0.0
        %469 = vmatprep.subr.mxu0 0.0
        %470 = vmatpush1.msra.mxu0 0.0
        %471 = vmatprep.subr.mxu0 0.0
        %472 = vmatpush1.msra.mxu0 0.0
        %473 = vmatprep.subr.mxu0 0.0
        %474 = vmatpush1.msra.mxu0 0.0
        %475 = vmatprep.subr.mxu0 0.0
        %476 = vmatpush1.msra.mxu0 0.0
        %477 = vmatprep.subr.mxu0 0.0
        %478 = vmatpush1.msra.mxu0 0.0
        %479 = vmatprep.subr.mxu0 0.0
        %480 = vmatpush1.msra.mxu0 0.0
        %481 = vmatprep.subr.mxu0 0.0
        %482 = vmatpush1.msra.mxu0 0.0
        %483 = vmatprep.subr.mxu0 0.0
        %484 = vmatpush1.msra.mxu0 0.0
        %485 = vmatprep.subr.mxu0 0.0
        %486 = vmatpush1.msra.mxu0 0.0
        %487 = vmatprep.subr.mxu0 0.0
        %488 = vmatpush1.msra.mxu0 0.0
        %489 = vmatprep.subr.mxu0 0.0
        %490 = vmatpush1.msra.mxu0 0.0
        %491 = vmatprep.subr.mxu0 0.0
        %492 = vmatpush1.msra.mxu0 0.0
        %493 = vmatprep.subr.mxu0 0.0
        %494 = vmatpush1.msra.mxu0 0.0
        %495 = vmatprep.subr.mxu0 0.0
        %v496 = vand.u32 %v228, 4294901760
        %497 = vmatpush1.msra.mxu0 %v496
        %498 = vmatprep.subr.mxu0 0.0
        %v499 = vand.u32 %v227, 4294901760
        %500 = vmatpush1.msra.mxu0 %v499
        %501 = vmatprep.subr.mxu0 0.0
        %502 = vmatpush2.msra.mxu0 0.0
        %503 = vmatprep.subr.mxu0 0.0
        %504 = vmatpush2.msra.mxu0 0.0
        %505 = vmatprep.subr.mxu0 0.0
        %506 = vmatpush2.msra.mxu0 0.0
        %507 = vmatprep.subr.mxu0 0.0
        %508 = vmatpush2.msra.mxu0 0.0
        %509 = vmatprep.subr.mxu0 0.0
        %510 = vmatpush2.msra.mxu0 0.0
        %511 = vmatprep.subr.mxu0 0.0
        %512 = vmatpush2.msra.mxu0 0.0
        %513 = vmatprep.subr.mxu0 0.0
        %514 = vmatpush2.msra.mxu0 0.0
        %515 = vmatprep.subr.mxu0 0.0
        %516 = vmatpush2.msra.mxu0 0.0
        %517 = vmatprep.subr.mxu0 0.0
        %518 = vmatpush2.msra.mxu0 0.0
        %519 = vmatprep.subr.mxu0 0.0
        %520 = vmatpush2.msra.mxu0 0.0
        %521 = vmatprep.subr.mxu0 0.0
        %522 = vmatpush2.msra.mxu0 0.0
        %523 = vmatprep.subr.mxu0 0.0
        %524 = vmatpush2.msra.mxu0 0.0
        %525 = vmatprep.subr.mxu0 0.0
        %526 = vmatpush2.msra.mxu0 0.0
        %527 = vmatprep.subr.mxu0 0.0
        %528 = vmatpush2.msra.mxu0 0.0
        %529 = vmatprep.subr.mxu0 0.0
        %530 = vmatpush2.msra.mxu0 0.0
        %531 = vmatprep.subr.mxu0 0.0
        %532 = vmatpush2.msra.mxu0 0.0
        %533 = vmatprep.mubr.f32.mxu0 0.0
        %v534 = vand.u32 %v231, 4294901760
        %v535 = vsub.f32 %v231, %v534
        %v536 = vand.u32 %v535, 4294901760
        %537 = vmatmul.mubr.f32.gmra.mxu0 %v536
        %v538 = vpop.f32.mrf.mxu0
        %v539 = vadd.f32 %v464, %v538
        %v540 = vpop.f32.mrf.mxu0
        %541 = vdwg.mxu0
        %542 = vmatprep.subr.mxu0 0.0
        %543 = vmatpush1.msra.mxu0 0.0
        %544 = vmatprep.subr.mxu0 0.0
        %545 = vmatpush1.msra.mxu0 0.0
        %546 = vmatprep.subr.mxu0 0.0
        %547 = vmatpush1.msra.mxu0 0.0
        %548 = vmatprep.subr.mxu0 0.0
        %549 = vmatpush1.msra.mxu0 0.0
        %550 = vmatprep.subr.mxu0 0.0
        %551 = vmatpush1.msra.mxu0 0.0
        %552 = vmatprep.subr.mxu0 0.0
        %553 = vmatpush1.msra.mxu0 0.0
        %554 = vmatprep.subr.mxu0 0.0
        %555 = vmatpush1.msra.mxu0 0.0
        %556 = vmatprep.subr.mxu0 0.0
        %557 = vmatpush1.msra.mxu0 0.0
        %558 = vmatprep.subr.mxu0 0.0
        %559 = vmatpush1.msra.mxu0 0.0
        %560 = vmatprep.subr.mxu0 0.0
        %561 = vmatpush1.msra.mxu0 0.0
        %562 = vmatprep.subr.mxu0 0.0
        %563 = vmatpush1.msra.mxu0 0.0
        %564 = vmatprep.subr.mxu0 0.0
        %565 = vmatpush1.msra.mxu0 0.0
        %566 = vmatprep.subr.mxu0 0.0
        %567 = vmatpush1.msra.mxu0 0.0
        %568 = vmatprep.subr.mxu0 0.0
        %569 = vmatpush1.msra.mxu0 0.0
        %570 = vmatprep.subr.mxu0 0.0
        %v571 = vand.u32 %v228, 4294901760
        %v572 = vsub.f32 %v228, %v571
        %v573 = vand.u32 %v572, 4294901760
        %574 = vmatpush1.msra.mxu0 %v573
        %575 = vmatprep.subr.mxu0 0.0
        %v576 = vand.u32 %v227, 4294901760
        %v577 = vsub.f32 %v227, %v576
        %v578 = vand.u32 %v577, 4294901760
        %579 = vmatpush1.msra.mxu0 %v578
        %580 = vmatprep.subr.mxu0 0.0
        %581 = vmatpush2.msra.mxu0 0.0
        %582 = vmatprep.subr.mxu0 0.0
        %583 = vmatpush2.msra.mxu0 0.0
        %584 = vmatprep.subr.mxu0 0.0
        %585 = vmatpush2.msra.mxu0 0.0
        %586 = vmatprep.subr.mxu0 0.0
        %587 = vmatpush2.msra.mxu0 0.0
        %588 = vmatprep.subr.mxu0 0.0
        %589 = vmatpush2.msra.mxu0 0.0
        %590 = vmatprep.subr.mxu0 0.0
        %591 = vmatpush2.msra.mxu0 0.0
        %592 = vmatprep.subr.mxu0 0.0
        %593 = vmatpush2.msra.mxu0 0.0
        %594 = vmatprep.subr.mxu0 0.0
        %595 = vmatpush2.msra.mxu0 0.0
        %596 = vmatprep.subr.mxu0 0.0
        %597 = vmatpush2.msra.mxu0 0.0
        %598 = vmatprep.subr.mxu0 0.0
        %599 = vmatpush2.msra.mxu0 0.0
        %600 = vmatprep.subr.mxu0 0.0
        %601 = vmatpush2.msra.mxu0 0.0
        %602 = vmatprep.subr.mxu0 0.0
        %603 = vmatpush2.msra.mxu0 0.0
        %604 = vmatprep.subr.mxu0 0.0
        %605 = vmatpush2.msra.mxu0 0.0
        %606 = vmatprep.subr.mxu0 0.0
        %607 = vmatpush2.msra.mxu0 0.0
        %608 = vmatprep.subr.mxu0 0.0
        %609 = vmatpush2.msra.mxu0 0.0
        %610 = vmatprep.subr.mxu0 0.0
        %611 = vmatpush2.msra.mxu0 0.0
        %612 = vmatprep.mubr.f32.mxu0 0.0
        %v613 = vand.u32 %v231, 4294901760
        %614 = vmatmul.mubr.f32.gmra.mxu0 %v613
        %v615 = vpop.f32.mrf.mxu0
        %v616 = vadd.f32 %v539, %v615
        %v617 = vpop.f32.mrf.mxu0
        %618 = vdwg.mxu0
        %619 = vmatprep.subr.mxu0 0.0
        %620 = vmatpush1.msra.mxu0 0.0
        %621 = vmatprep.subr.mxu0 0.0
        %622 = vmatpush1.msra.mxu0 0.0
        %623 = vmatprep.subr.mxu0 0.0
        %624 = vmatpush1.msra.mxu0 0.0
        %625 = vmatprep.subr.mxu0 0.0
        %626 = vmatpush1.msra.mxu0 0.0
        %627 = vmatprep.subr.mxu0 0.0
        %628 = vmatpush1.msra.mxu0 0.0
        %629 = vmatprep.subr.mxu0 0.0
        %630 = vmatpush1.msra.mxu0 0.0
        %631 = vmatprep.subr.mxu0 0.0
        %632 = vmatpush1.msra.mxu0 0.0
        %633 = vmatprep.subr.mxu0 0.0
        %634 = vmatpush1.msra.mxu0 0.0
        %635 = vmatprep.subr.mxu0 0.0
        %636 = vmatpush1.msra.mxu0 0.0
        %637 = vmatprep.subr.mxu0 0.0
        %638 = vmatpush1.msra.mxu0 0.0
        %639 = vmatprep.subr.mxu0 0.0
        %640 = vmatpush1.msra.mxu0 0.0
        %641 = vmatprep.subr.mxu0 0.0
        %642 = vmatpush1.msra.mxu0 0.0
        %643 = vmatprep.subr.mxu0 0.0
        %644 = vmatpush1.msra.mxu0 0.0
        %645 = vmatprep.subr.mxu0 0.0
        %646 = vmatpush1.msra.mxu0 0.0
        %647 = vmatprep.subr.mxu0 0.0
        %v648 = vand.u32 %v228, 4294901760
        %649 = vmatpush1.msra.mxu0 %v648
        %650 = vmatprep.subr.mxu0 0.0
        %v651 = vand.u32 %v227, 4294901760
        %652 = vmatpush1.msra.mxu0 %v651
        %653 = vmatprep.subr.mxu0 0.0
        %654 = vmatpush2.msra.mxu0 0.0
        %655 = vmatprep.subr.mxu0 0.0
        %656 = vmatpush2.msra.mxu0 0.0
        %657 = vmatprep.subr.mxu0 0.0
        %658 = vmatpush2.msra.mxu0 0.0
        %659 = vmatprep.subr.mxu0 0.0
        %660 = vmatpush2.msra.mxu0 0.0
        %661 = vmatprep.subr.mxu0 0.0
        %662 = vmatpush2.msra.mxu0 0.0
        %663 = vmatprep.subr.mxu0 0.0
        %664 = vmatpush2.msra.mxu0 0.0
        %665 = vmatprep.subr.mxu0 0.0
        %666 = vmatpush2.msra.mxu0 0.0
        %667 = vmatprep.subr.mxu0 0.0
        %668 = vmatpush2.msra.mxu0 0.0
        %669 = vmatprep.subr.mxu0 0.0
        %670 = vmatpush2.msra.mxu0 0.0
        %671 = vmatprep.subr.mxu0 0.0
        %672 = vmatpush2.msra.mxu0 0.0
        %673 = vmatprep.subr.mxu0 0.0
        %674 = vmatpush2.msra.mxu0 0.0
        %675 = vmatprep.subr.mxu0 0.0
        %676 = vmatpush2.msra.mxu0 0.0
        %677 = vmatprep.subr.mxu0 0.0
        %678 = vmatpush2.msra.mxu0 0.0
        %679 = vmatprep.subr.mxu0 0.0
        %680 = vmatpush2.msra.mxu0 0.0
        %681 = vmatprep.subr.mxu0 0.0
        %682 = vmatpush2.msra.mxu0 0.0
        %683 = vmatprep.subr.mxu0 0.0
        %684 = vmatpush2.msra.mxu0 0.0
        %685 = vmatprep.mubr.f32.mxu0 0.0
        %v686 = vand.u32 %v231, 4294901760
        %687 = vmatmul.mubr.f32.gmra.mxu0 %v686
        %v688 = vpop.f32.mrf.mxu0
        %v689 = vadd.f32 %v616, %v688
        %v690 = vpop.f32.mrf.mxu0
        %691 = vdwg.mxu0
        %v692 = vld [vmem:[%s213] sm:$0x1]
        %vm693 = vcmp.ne.s32.totalorder %v692, 0
        %v694 = vsel %vm693, 1, 0
        %v695 = vlaneseq
        %v696 = vshrl.u32 %v695, 7
        %v697 = vsub.s32 0, %v696
        %v698 = vrot.slane %v694, %v697
        %699 = vset.pattern.permute.xlu0 0
        %700 = vperm.xlu0 %699, %v698
        %v701 = vpop.permute.xlu0 %700
        %vm702 = vcmp.eq.s32.totalorder %v701, 1
        %v703 = vsel %vm702, %v689, %v214
        %vm704 = vcmask 125952
        %705 = vst.msk [vmem:[%s207] sm:$0xf] %vm704, %v703
        %s706 = sand.u32 %s106, 1
        %s707 = scalar_lea.sflag [#allocation4], %s706
        %s708 = sand.u32 %s106, 1
        %s709 = smul.addr %s708, 4
        %s710 = scalar_lea.vmem [#allocation5], %s709
        // Predicated region
        $region37: #{tpu_custom_call.1} parent=31 // pred_check
          %p711 = pneg %p116
        $region38: #{tpu_custom_call.1} parent=31 // pred_check_branch
          %713 = sbr.rel (%p711) target = $region40
        $region39: #{tpu_custom_call.1} parent=31 // pred_region
          %s715 = ssub.s32 64, 64
          %716 = vsyncadd %s707, %s715
          %s717 = smul.addr %s20, 64
          %s718 = scalar_lea.hbm %s3, %s717
          %s720 = sshll.u32 %s710, 4
          %s721 = int_to_ptr.vmem [resolvable:$true] %s720
          %723 = dma.vmem_to_hbm [thread:$0]  %s721, 64, %s718, %s707
        $region40: #{tpu_custom_call.1} parent=31 // pred_fallthru
          _
      $region32: #{tpu_custom_call.1} parent=5 // pred_fallthru
        _
      %p724 = scmp.le.s32.totalorder 2, %s15
      // Predicated region
      $region41: #{tpu_custom_call.1} parent=5 // pred_check
        %p725 = pneg %p724
      $region42: #{tpu_custom_call.1} parent=5 // pred_check_branch
        %727 = sbr.rel (%p725) target = $region44
      $region43: #{tpu_custom_call.1} parent=5 // pred_region
        %s728 = ssub.s32 %s15, 2
        // Predicated region
        $region45: #{tpu_custom_call.1} parent=43 // pred_check
          %p729 = pneg %p122
        $region46: #{tpu_custom_call.1} parent=43 // pred_check_branch
          %731 = sbr.rel (%p729) target = $region48
        $region47: #{tpu_custom_call.1} parent=43 // pred_region
          %s732 = sand.u32 %s107, 1
          %s733 = scalar_lea.sflag [#allocation4], %s732
          %s734 = sand.u32 %s107, 1
          %s735 = smul.addr %s734, 4
          %s736 = scalar_lea.vmem [#allocation5], %s735
          %737 = dma.done %s733, 64
        $region48: #{tpu_custom_call.1} parent=43 // pred_fallthru
          _
      $region44: #{tpu_custom_call.1} parent=5 // pred_fallthru
        _
    $region6: #{tpu_custom_call.1} parent=1 // loop_footer
      %s19 = sadd.s32 1, %s15
    $region7: #{tpu_custom_call.1} parent=1 // loop_footer_branch
      %14 = sbr.rel target = $region3
    $region8: #{tpu_custom_call.1} parent=1 // loop_exit
      _
    %738 = vsyncpa [#allocation3], 1
    %s739 = scalar_lea.sflag [#allocation3], 1
    %740 = vsyncpa %s739, 1
    %741 = vsyncpa [#allocation4], 1
    %s742 = scalar_lea.sflag [#allocation4], 1
    %743 = vsyncpa %s742, 1

</llo_original>
